<compile_context>
chip_gen: v7x
topology: tpu7x:2x2x1
jax: 0.10.0
libtpu: 0.0.40
codegen_flags: <defaults>
</compile_context>

<pallas_src>
import functools
import math

import jax
import jax.numpy as jnp
from jax.experimental import pallas as pl
from jax.experimental.pallas import tpu as pltpu


def _round_up(x: int, m: int) -> int:
    return ((x + m - 1) // m) * m


# ----------------------------------------------------------------------------
# Kernels
# ----------------------------------------------------------------------------
def _gather_vmem_kernel(idx_ref, w_ref, out_ref, *, rows_per_step: int):
    """out[base+r, :] = w[idx[base+r], :], with the whole table resident in VMEM."""
    base = pl.program_id(0) * rows_per_step
    for r in range(rows_per_step):                       # static unroll (R small)
        row = idx_ref[base + r]                          # SMEM scalar read
        out_ref[pl.ds(r, 1), :] = w_ref[pl.ds(row, 1), :]


def _gather_dma_kernel(idx_ref, w_hbm_ref, out_ref, sem, *, rows_per_step: int):
    """Row gather via R concurrent HBM->VMEM DMAs straight into the out tile."""
    base = pl.program_id(0) * rows_per_step
    copies = []
    for r in range(rows_per_step):                       # issue all: R in flight
        row = idx_ref[base + r]
        cp = pltpu.make_async_copy(w_hbm_ref.at[row], out_ref.at[r], sem)
        cp.start()
        copies.append(cp)
    for cp in copies:                                    # then drain
        cp.wait()


# ----------------------------------------------------------------------------
# Pallas wrapper
# ----------------------------------------------------------------------------
@functools.partial(jax.jit, static_argnames=("rows_per_step", "use_dma_gather"))
def embedding_lookup(indices, weight_padded, *, rows_per_step: int,
                     use_dma_gather: bool):
    """Pallas embedding row gather: out[i] = weight_padded[indices[i]].

    Args:
      indices:       int32 [N_pad], N_pad a multiple of rows_per_step
      weight_padded: [V_pad, D_pad]; V_pad % 8 == 0, D_pad % 128 == 0
    Returns:
      [N_pad, D_pad] of weight_padded.dtype
    """
    n_pad = indices.shape[0]
    v_pad, d_pad = weight_padded.shape
    assert n_pad % rows_per_step == 0
    grid = (n_pad // rows_per_step,)

    # OOB defence: invalid ids map to the UNK row 0 (never to the last row).
    idx = indices.astype(jnp.int32)
    idx = jnp.where((idx >= 0) & (idx < v_pad), idx, 0)

    itemsize = weight_padded.dtype.itemsize
    table_bytes = v_pad * d_pad * itemsize
    tile_bytes = rows_per_step * d_pad * itemsize
    cost = pl.CostEstimate(
        flops=0, transcendentals=0,
        bytes_accessed=2 * n_pad * d_pad * itemsize + n_pad * 4)

    out_spec = pl.BlockSpec((rows_per_step, d_pad), lambda i, idx_ref: (i, 0))
    out_shape = jax.ShapeDtypeStruct((n_pad, d_pad), weight_padded.dtype)

    if use_dma_gather:
        kernel = functools.partial(_gather_dma_kernel, rows_per_step=rows_per_step)
        in_specs = [pl.BlockSpec(memory_space=pl.ANY)]     # table stays in HBM
        scratch = [pltpu.SemaphoreType.DMA(())]
        vmem_need = 4 * tile_bytes + (4 << 20)
    else:
        kernel = functools.partial(_gather_vmem_kernel, rows_per_step=rows_per_step)
        # Constant block index -> table DMA'd once, reused across grid steps.
        in_specs = [pl.BlockSpec((v_pad, d_pad), lambda i, idx_ref: (0, 0))]
        scratch = []
        vmem_need = 2 * table_bytes + 4 * tile_bytes + (4 << 20)

    return pl.pallas_call(
        kernel,
        out_shape=out_shape,
        grid_spec=pltpu.PrefetchScalarGridSpec(
            num_scalar_prefetch=1,             # indices land in SMEM pre-grid
            grid=grid,
            in_specs=in_specs,
            out_specs=out_spec,
            scratch_shapes=scratch,
        ),
        compiler_params=pltpu.CompilerParams(
            dimension_semantics=("parallel",),                 # rows independent
            vmem_limit_bytes=int(max(vmem_need, 16 << 20)),
        ),
        cost_estimate=cost,
    )(idx, weight_padded)


# ----------------------------------------------------------------------------
# Module
# ----------------------------------------------------------------------------
# Tables up to this size stay whole in VMEM (path A); conservative vs v5e's
# 16 MiB scoped-VMEM default and v7x's 64 MiB physical VMEM.
_VMEM_TABLE_BYTES_MAX = 8 * 1024 * 1024


def _pick_rows_per_step(n: int) -> int:
    if n <= 64:
        return 8
    if n <= 512:
        return 64
    return 128


class DynamicVocabEmbedder:
    """JAX/Pallas port of the PyTorch DynamicVocabEmbedder.

    Dynamically constructs a vocabulary, assigning embeddings to new inputs.
    After max_vocab_size unique inputs have been seen, new inputs map to
    index 0 (UNK).
    """

    def __init__(self, embedding_dim: int, max_vocab_size: int, key,
                 dtype=jnp.float32) -> None:
        self._embedding_dim = embedding_dim
        self._max_vocab_size = max_vocab_size
        self._input_to_index = {}
        self._vocab_size = 1

        # xavier_uniform_ on [V, D]: U(-a, a), a = sqrt(6 / (V + D))
        bound = math.sqrt(6.0 / (max_vocab_size + embedding_dim))
        w = jax.random.uniform(
            key, (max_vocab_size, embedding_dim),
            dtype=jnp.float32, minval=-bound, maxval=bound)
        self._weight = w  # logical [V, D] table (reference semantics)

        # TPU-friendly padded copy: lanes (last dim) -> multiple of 128 for
        # unmasked vector stores, rows -> multiple of 8 sublanes.
        # NOTE: pass dtype=jnp.bfloat16 to halve HBM traffic if downstream
        # tolerates bf16; default stays f32 to match the PyTorch module exactly.
        self._d_pad = _round_up(embedding_dim, 128)
        self._v_pad = _round_up(max_vocab_size, 8)
        self._weight_padded = (
            jnp.zeros((self._v_pad, self._d_pad), dtype)
            .at[:max_vocab_size, :embedding_dim].set(w.astype(dtype)))

        table_bytes = (self._v_pad * self._d_pad
                       * self._weight_padded.dtype.itemsize)
        self._use_dma_gather = table_bytes > _VMEM_TABLE_BYTES_MAX

    @property
    def embedding_dim(self) -> int:
        return self._embedding_dim

    def forward(self, inputs):
        # Host-side dynamic vocab bookkeeping (Python dict; inherently
        # stateful, no Pallas equivalent).
        def input_to_index(inp):
            if (inp not in self._input_to_index
                    and self._vocab_size < self._max_vocab_size):
                self._input_to_index[inp] = self._vocab_size
                self._vocab_size += 1
            return self._input_to_index.get(inp, 0)

        idx_list = [input_to_index(inp) for inp in inputs]
        n = len(idx_list)
        rows = _pick_rows_per_step(n)
        # Bucket N to a power of two (>= rows) so batch-length jitter does not
        # recompile; padding rows map to UNK (row 0) and are sliced off below.
        n_pad = max(rows, 1 << max(0, (n - 1).bit_length()))
        idx_list = idx_list + [0] * (n_pad - n)
        indices = jnp.asarray(idx_list, dtype=jnp.int32)

        out_padded = embedding_lookup(
            indices, self._weight_padded,
            rows_per_step=rows, use_dma_gather=self._use_dma_gather)
        # Slice back to the logical [N, embedding_dim]; the kernel itself stays
        # lane-dense and bucket-sized.
        return out_padded[:n, :self._embedding_dim].astype(jnp.float32)

    __call__ = forward


# ----------------------------------------------------------------------------
# Demo / self-check
# ----------------------------------------------------------------------------
if __name__ == "__main__":
    key = jax.random.PRNGKey(0)

    embedding_dim = 32
    max_vocab_size = 16
    embedder = DynamicVocabEmbedder(embedding_dim, max_vocab_size, key)

    # Batch of 8 hashable inputs (strings) with repeats so the dynamic-vocab
    # path is exercised.
    inputs = ["tok_a", "tok_b", "tok_a", "tok_c",
              "tok_d", "tok_b", "tok_e", "tok_a"]

    out = jax.block_until_ready(embedder(inputs))

    # Reference: plain-JAX gather on the logical weight table.
    ref_indices = jnp.asarray(
        [embedder._input_to_index.get(t, 0) for t in inputs], dtype=jnp.int32)
    ref = embedder._weight[ref_indices]
    assert out.shape == (len(inputs), embedding_dim)
    assert jnp.allclose(out, ref, atol=1e-6), "mismatch vs reference (VMEM path)"

    # Also exercise the large-table manual-DMA gather path on the same data.
    out_dma = jax.block_until_ready(
        embedding_lookup(ref_indices, embedder._weight_padded,
                         rows_per_step=8, use_dma_gather=True))
    assert jnp.allclose(out_dma[:, :embedding_dim], ref, atol=1e-6), \
        "mismatch vs reference (DMA path)"

    print("KERNEL_OK")
</pallas_src>

<mosaic_0001>
module attributes {stable_mosaic.version = 11 : i64} {
  func.func @_gather_vmem_kernel(%arg0: i32, %arg1: memref<8xi32, #tpu.memory_space<smem>>, %arg2: memref<16x128xf32, #tpu.memory_space<vmem>>, %arg3: memref<8x128xf32, #tpu.memory_space<vmem>>) attributes {dimension_semantics = [#tpu.dimension_semantics<parallel>], iteration_bounds = array<i64: 1>, scalar_prefetch = 1 : i64, scratch_operands = 0 : i64, tpu.core_type = #tpu.core_type<tc>, window_params = [{pipeline_mode = #tpu.pipeline_mode<synchronous>, transform_indices = @transform_0, window_bounds = array<i64: 16, 128>}, {transform_indices = @transform_1, window_bounds = array<i64: 8, 128>}]} {
    %c8_i32 = arith.constant 8 : i32
    %0 = arith.muli %arg0, %c8_i32 : i32
    %c0_i32 = arith.constant 0 : i32
    %1 = arith.addi %0, %c0_i32 : i32
    %2 = arith.index_cast %1 : i32 to index
    %3 = memref.load %arg1[%2] : memref<8xi32, #tpu.memory_space<smem>>
    %4 = arith.index_cast %3 : i32 to index
    %c0 = arith.constant 0 : index
    %5 = vector.load %arg2[%4, %c0] : memref<16x128xf32, #tpu.memory_space<vmem>>, vector<1x128xf32>
    %c0_0 = arith.constant 0 : index
    %c0_1 = arith.constant 0 : index
    %6 = vector.load %arg3[%c0_0, %c0_1] : memref<8x128xf32, #tpu.memory_space<vmem>>, vector<1x128xf32>
    tpu.vector_store %arg3[%c0_0, %c0_1], %5 {strides = array<i32>} : memref<8x128xf32, #tpu.memory_space<vmem>>, vector<1x128xf32>,
    %c1_i32 = arith.constant 1 : i32
    %7 = arith.addi %0, %c1_i32 : i32
    %8 = arith.index_cast %7 : i32 to index
    %9 = memref.load %arg1[%8] : memref<8xi32, #tpu.memory_space<smem>>
    %10 = arith.index_cast %9 : i32 to index
    %c0_2 = arith.constant 0 : index
    %11 = vector.load %arg2[%10, %c0_2] : memref<16x128xf32, #tpu.memory_space<vmem>>, vector<1x128xf32>
    %c1 = arith.constant 1 : index
    %c0_3 = arith.constant 0 : index
    %12 = vector.load %arg3[%c1, %c0_3] : memref<8x128xf32, #tpu.memory_space<vmem>>, vector<1x128xf32>
    tpu.vector_store %arg3[%c1, %c0_3], %11 {strides = array<i32>} : memref<8x128xf32, #tpu.memory_space<vmem>>, vector<1x128xf32>,
    %c2_i32 = arith.constant 2 : i32
    %13 = arith.addi %0, %c2_i32 : i32
    %14 = arith.index_cast %13 : i32 to index
    %15 = memref.load %arg1[%14] : memref<8xi32, #tpu.memory_space<smem>>
    %16 = arith.index_cast %15 : i32 to index
    %c0_4 = arith.constant 0 : index
    %17 = vector.load %arg2[%16, %c0_4] : memref<16x128xf32, #tpu.memory_space<vmem>>, vector<1x128xf32>
    %c2 = arith.constant 2 : index
    %c0_5 = arith.constant 0 : index
    %18 = vector.load %arg3[%c2, %c0_5] : memref<8x128xf32, #tpu.memory_space<vmem>>, vector<1x128xf32>
    tpu.vector_store %arg3[%c2, %c0_5], %17 {strides = array<i32>} : memref<8x128xf32, #tpu.memory_space<vmem>>, vector<1x128xf32>,
    %c3_i32 = arith.constant 3 : i32
    %19 = arith.addi %0, %c3_i32 : i32
    %20 = arith.index_cast %19 : i32 to index
    %21 = memref.load %arg1[%20] : memref<8xi32, #tpu.memory_space<smem>>
    %22 = arith.index_cast %21 : i32 to index
    %c0_6 = arith.constant 0 : index
    %23 = vector.load %arg2[%22, %c0_6] : memref<16x128xf32, #tpu.memory_space<vmem>>, vector<1x128xf32>
    %c3 = arith.constant 3 : index
    %c0_7 = arith.constant 0 : index
    %24 = vector.load %arg3[%c3, %c0_7] : memref<8x128xf32, #tpu.memory_space<vmem>>, vector<1x128xf32>
    tpu.vector_store %arg3[%c3, %c0_7], %23 {strides = array<i32>} : memref<8x128xf32, #tpu.memory_space<vmem>>, vector<1x128xf32>,
    %c4_i32 = arith.constant 4 : i32
    %25 = arith.addi %0, %c4_i32 : i32
    %26 = arith.index_cast %25 : i32 to index
    %27 = memref.load %arg1[%26] : memref<8xi32, #tpu.memory_space<smem>>
    %28 = arith.index_cast %27 : i32 to index
    %c0_8 = arith.constant 0 : index
    %29 = vector.load %arg2[%28, %c0_8] : memref<16x128xf32, #tpu.memory_space<vmem>>, vector<1x128xf32>
    %c4 = arith.constant 4 : index
    %c0_9 = arith.constant 0 : index
    %30 = vector.load %arg3[%c4, %c0_9] : memref<8x128xf32, #tpu.memory_space<vmem>>, vector<1x128xf32>
    tpu.vector_store %arg3[%c4, %c0_9], %29 {strides = array<i32>} : memref<8x128xf32, #tpu.memory_space<vmem>>, vector<1x128xf32>,
    %c5_i32 = arith.constant 5 : i32
    %31 = arith.addi %0, %c5_i32 : i32
    %32 = arith.index_cast %31 : i32 to index
    %33 = memref.load %arg1[%32] : memref<8xi32, #tpu.memory_space<smem>>
    %34 = arith.index_cast %33 : i32 to index
    %c0_10 = arith.constant 0 : index
    %35 = vector.load %arg2[%34, %c0_10] : memref<16x128xf32, #tpu.memory_space<vmem>>, vector<1x128xf32>
    %c5 = arith.constant 5 : index
    %c0_11 = arith.constant 0 : index
    %36 = vector.load %arg3[%c5, %c0_11] : memref<8x128xf32, #tpu.memory_space<vmem>>, vector<1x128xf32>
    tpu.vector_store %arg3[%c5, %c0_11], %35 {strides = array<i32>} : memref<8x128xf32, #tpu.memory_space<vmem>>, vector<1x128xf32>,
    %c6_i32 = arith.constant 6 : i32
    %37 = arith.addi %0, %c6_i32 : i32
    %38 = arith.index_cast %37 : i32 to index
    %39 = memref.load %arg1[%38] : memref<8xi32, #tpu.memory_space<smem>>
    %40 = arith.index_cast %39 : i32 to index
    %c0_12 = arith.constant 0 : index
    %41 = vector.load %arg2[%40, %c0_12] : memref<16x128xf32, #tpu.memory_space<vmem>>, vector<1x128xf32>
    %c6 = arith.constant 6 : index
    %c0_13 = arith.constant 0 : index
    %42 = vector.load %arg3[%c6, %c0_13] : memref<8x128xf32, #tpu.memory_space<vmem>>, vector<1x128xf32>
    tpu.vector_store %arg3[%c6, %c0_13], %41 {strides = array<i32>} : memref<8x128xf32, #tpu.memory_space<vmem>>, vector<1x128xf32>,
    %c7_i32 = arith.constant 7 : i32
    %43 = arith.addi %0, %c7_i32 : i32
    %44 = arith.index_cast %43 : i32 to index
    %45 = memref.load %arg1[%44] : memref<8xi32, #tpu.memory_space<smem>>
    %46 = arith.index_cast %45 : i32 to index
    %c0_14 = arith.constant 0 : index
    %47 = vector.load %arg2[%46, %c0_14] : memref<16x128xf32, #tpu.memory_space<vmem>>, vector<1x128xf32>
    %c7 = arith.constant 7 : index
    %c0_15 = arith.constant 0 : index
    %48 = vector.load %arg3[%c7, %c0_15] : memref<8x128xf32, #tpu.memory_space<vmem>>, vector<1x128xf32>
    tpu.vector_store %arg3[%c7, %c0_15], %47 {strides = array<i32>} : memref<8x128xf32, #tpu.memory_space<vmem>>, vector<1x128xf32>,
    return
  }
  func.func @transform_0(%arg0: i32, %arg1: memref<8xi32, #tpu.memory_space<smem>>) -> (i32, i32) {
    %c0_i32 = arith.constant 0 : i32
    %c0_i32_0 = arith.constant 0 : i32
    %c0_i32_1 = arith.constant 0 : i32
    return %c0_i32, %c0_i32_0 : i32, i32
  }
  func.func @transform_1(%arg0: i32, %arg1: memref<8xi32, #tpu.memory_space<smem>>) -> (i32, i32) {
    %c0_i32 = arith.constant 0 : i32
    %c0_i32_0 = arith.constant 0 : i32
    return %arg0, %c0_i32 : i32, i32
  }
}

</mosaic_0001>

<llo_original>
// kernel: embedding_lookup.1
$region0: #{embedding_lookup.1}
  #allocation0 [shape = 'u32[]', space=smem, size = 0x4, offset = 0x4, fixed_abs, tag = 'smem constant byte address 0x4 - core index']
  #allocation1 [shape = 'u32[144,128]{1,0:T(1,128)}', space=vmem, size = 0x12000, scoped, tag = 'internal scratch']
  #allocation2 [shape = 's32[1]{0}', space=sflag, size = 0x4, scoped, tag = 'scoped memory for embedding_lookup.1']
  #allocation3 [shape = 'u8[512]{0}', space=smem, size = 0x200, scoped, tag = 'prefetched SMEM operand 0']
  %s0 = inlined_call_operand.vmem [shape: s32[8], index: 0, kind: input, shape index: {}]
  %s1 = inlined_call_operand.hbm [shape: f32[16,128], index: 1, kind: input, shape index: {}]
  %s2 = inlined_call_operand.hbm [shape: f32[8,128], index: 2, kind: output, shape index: {}]
  %s3 = sld [smem:[#allocation0]]
  $region18: #{embedding_lookup.1} parent=0
    _
  %s5 = ssub.s32 1, %s3
  %s6 = scalar_select 0, %s5, %s3
  %s7 = sshll.u32 %s0, 4
  %s8 = int_to_ptr.vmem [resolvable:$true] %s7
  %10 = dma.vmem_to_smem %s8, 16, [#allocation3], [#allocation2]
  %11 = dma.done [#allocation2], 16
  %12 = sfence
  $region1: #{embedding_lookup.1} parent=0
    #allocation4 [shape = 'u8[8192]{0}', space=vmem, size = 0x2000, scoped, tag = 'input window, operand 1, single buffered']
    #allocation5 [shape = 's32[1]{0}', space=sflag, size = 0x4, scoped, tag = 'scoped memory for embedding_lookup.1']
    #allocation6 [shape = 's32[1]{0}', space=sflag, size = 0x4, scoped, tag = 'scoped memory for embedding_lookup.1']
    #allocation7 [shape = 'u8[4096]{0}', space=vmem, size = 0x1000, scoped, tag = 'output window, operand 0, single buffered']
    %13 = vsyncpa [#allocation5], 0
    %14 = vsyncpa [#allocation6], 0
    // Predicated region
    $region2: #{embedding_lookup.1} parent=1 // pred_check
      _
    $region3: #{embedding_lookup.1} parent=1 // pred_check_branch
      %16 = sbr.rel (0) target = $region5
    $region4: #{embedding_lookup.1} parent=1 // pred_region
      %s18 = ssub.s32 256, 256
      %19 = vsyncadd [#allocation5], %s18
      %s20 = sshll.u32 [#allocation4], 4
      %s21 = int_to_ptr.vmem [resolvable:$true] %s20
      %26 = dma.hbm_to_vmem [thread:$0]  %s1, 256, %s21, [#allocation5], 128, 128, 8
    $region5: #{embedding_lookup.1} parent=1 // pred_fallthru
      _
    // Predicated region
    $region6: #{embedding_lookup.1} parent=1 // pred_check
      _
    $region7: #{embedding_lookup.1} parent=1 // pred_check_branch
      %28 = sbr.rel (0) target = $region9
    $region8: #{embedding_lookup.1} parent=1 // pred_region
      %29 = dma.done [#allocation5], 256
    $region9: #{embedding_lookup.1} parent=1 // pred_fallthru
      _
    %s30 = smul.u32 0, 8
    %s31 = sld [smem:[#allocation3 + %s30]]
    %s32 = scalar_lea.vmem [#allocation4], %s31
    %v33 = vld [vmem:[%s32] sm:$0x1]
    %34 = vst [vmem:[#allocation7] sm:$0x1] %v33
    %s35 = sadd.s32 %s30, 1
    %s36 = sld [smem:[#allocation3 + %s35]]
    %s37 = scalar_lea.vmem [#allocation4], %s36
    %v38 = vld [vmem:[%s37] sm:$0x1]
    %39 = vst [vmem:[#allocation7 + $0x1] sm:$0x1] %v38
    %s40 = sadd.s32 %s30, 2
    %s41 = sld [smem:[#allocation3 + %s40]]
    %s42 = scalar_lea.vmem [#allocation4], %s41
    %v43 = vld [vmem:[%s42] sm:$0x1]
    %44 = vst [vmem:[#allocation7 + $0x2] sm:$0x1] %v43
    %s45 = sadd.s32 %s30, 3
    %s46 = sld [smem:[#allocation3 + %s45]]
    %s47 = scalar_lea.vmem [#allocation4], %s46
    %v48 = vld [vmem:[%s47] sm:$0x1]
    %49 = vst [vmem:[#allocation7 + $0x3] sm:$0x1] %v48
    %s50 = sadd.s32 %s30, 4
    %s51 = sld [smem:[#allocation3 + %s50]]
    %s52 = scalar_lea.vmem [#allocation4], %s51
    %v53 = vld [vmem:[%s52] sm:$0x1]
    %54 = vst [vmem:[#allocation7 + $0x4] sm:$0x1] %v53
    %s55 = sadd.s32 %s30, 5
    %s56 = sld [smem:[#allocation3 + %s55]]
    %s57 = scalar_lea.vmem [#allocation4], %s56
    %v58 = vld [vmem:[%s57] sm:$0x1]
    %59 = vst [vmem:[#allocation7 + $0x5] sm:$0x1] %v58
    %s60 = sadd.s32 %s30, 6
    %s61 = sld [smem:[#allocation3 + %s60]]
    %s62 = scalar_lea.vmem [#allocation4], %s61
    %v63 = vld [vmem:[%s62] sm:$0x1]
    %64 = vst [vmem:[#allocation7 + $0x6] sm:$0x1] %v63
    %s65 = sadd.s32 %s30, 7
    %s66 = sld [smem:[#allocation3 + %s65]]
    %s67 = scalar_lea.vmem [#allocation4], %s66
    %v68 = vld [vmem:[%s67] sm:$0x1]
    %69 = vst [vmem:[#allocation7 + $0x7] sm:$0x1] %v68
    // Predicated region
    $region10: #{embedding_lookup.1} parent=1 // pred_check
      _
    $region11: #{embedding_lookup.1} parent=1 // pred_check_branch
      %71 = sbr.rel (0) target = $region13
    $region12: #{embedding_lookup.1} parent=1 // pred_region
      %s73 = ssub.s32 128, 128
      %74 = vsyncadd [#allocation6], %s73
      %s76 = sshll.u32 [#allocation7], 4
      %s77 = int_to_ptr.vmem [resolvable:$true] %s76
      %79 = dma.vmem_to_hbm [thread:$0]  %s77, 128, %s2, [#allocation6]
    $region13: #{embedding_lookup.1} parent=1 // pred_fallthru
      _
    // Predicated region
    $region14: #{embedding_lookup.1} parent=1 // pred_check
      _
    $region15: #{embedding_lookup.1} parent=1 // pred_check_branch
      %81 = sbr.rel (0) target = $region17
    $region16: #{embedding_lookup.1} parent=1 // pred_region
      %82 = dma.done [#allocation6], 128
    $region17: #{embedding_lookup.1} parent=1 // pred_fallthru
      _
    %83 = vsyncpa [#allocation5], 1
    %84 = vsyncpa [#allocation6], 1

</llo_original>
